<compile_context>
chip_gen: v7x
topology: tpu7x:2x2x1
jax: 0.10.0
libtpu: 0.0.40
codegen_flags: <defaults>
</compile_context>

<pallas_src>
import jax
import jax.numpy as jnp
from jax.experimental import pallas as pl
from jax.experimental.pallas import tpu as pltpu


def _seq2seq_attention_kernel(dec_ref, enc_ref, out_ref):
    # dec_ref: (TB, H)    decoder hidden states for this batch tile
    # enc_ref: (TB, S, H) encoder states for this batch tile
    # out_ref: (TB, H)    context vectors (lane-dense slab store)
    dec = dec_ref[...].astype(jnp.float32)               # (TB, H)
    enc = enc_ref[...].astype(jnp.float32)                # (TB, S, H)

    # scores[b, s] = sum_h enc[b, s, h] * dec[b, h]
    # VPU multiply + reduce over H, accumulated in f32.  Result (TB, S) with S on
    # the lane axis so the softmax reductions run lane-dense.
    scores = jnp.sum(enc * dec[:, None, :], axis=-1)      # (TB, S)

    # Softmax over the sequence axis (PyTorch dim=1), numerically stabilized.
    m = jnp.max(scores, axis=-1, keepdims=True)            # (TB, 1)
    e = jnp.exp(scores - m)                                 # (TB, S)  EUP
    denom = jnp.sum(e, axis=-1, keepdims=True)              # (TB, 1)

    # context[b, h] = (sum_s e[b, s] * enc[b, s, h]) / denom[b]
    # Weighted sum on the VPU (reduce over S), then one exact reciprocal per row.
    ctx = jnp.sum(e[:, :, None] * enc, axis=1)               # (TB, H)
    ctx = ctx * pl.reciprocal(denom)                          # exact 1/x, (TB,1) bcast

    out_ref[...] = ctx.astype(out_ref.dtype)


def seq2seq_attention(decoder_hidden, encoder_states):
    """decoder_hidden: (B, H), encoder_states: (B, S, H) -> (B, H)"""
    B, H = decoder_hidden.shape
    Bs, S, Hs = encoder_states.shape
    assert B == Bs and H == Hs

    itemsize = jnp.dtype(encoder_states.dtype).itemsize
    # Sublane-aligned batch tile: 8 rows for 4-byte dtypes, 16 for 2-byte, 32 for 1-byte.
    sub = 8 if itemsize >= 4 else (16 if itemsize == 2 else 32)

    # Cap TB so one encoder buffer stays <= ~8 MiB (x2 for double buffering still
    # fits the scoped VMEM budget on v5e/v6e/v7x with the limit raised below).
    budget = 8 * 1024 * 1024
    per_row = max(S * H * itemsize, 1)
    cap = max(sub, (budget // per_row) // sub * sub)
    tb = int(min(cap, pl.cdiv(B, sub) * sub))

    # Pad batch to a multiple of TB (padded rows are computed then discarded;
    # softmax of all-zero scores is well defined, no NaNs).
    Bp = pl.cdiv(B, tb) * tb
    if Bp != B:
        pad = Bp - B
        decoder_hidden = jnp.pad(decoder_hidden, ((0, pad), (0, 0)))
        encoder_states = jnp.pad(encoder_states, ((0, pad), (0, 0), (0, 0)))

    out = pl.pallas_call(
        _seq2seq_attention_kernel,
        out_shape=jax.ShapeDtypeStruct((Bp, H), decoder_hidden.dtype),
        grid_spec=pltpu.PrefetchScalarGridSpec(
            num_scalar_prefetch=0,
            grid=(Bp // tb,),
            in_specs=[
                pl.BlockSpec((tb, H), lambda b: (b, 0)),
                pl.BlockSpec((tb, S, H), lambda b: (b, 0, 0)),
            ],
            out_specs=pl.BlockSpec((tb, H), lambda b: (b, 0)),
        ),
        compiler_params=pltpu.CompilerParams(
            dimension_semantics=("parallel",),
            # Above the 16/32 MiB scoped defaults, below every generation's
            # physical VMEM (64 MiB on v7x).
            vmem_limit_bytes=48 * 1024 * 1024,
        ),
    )(decoder_hidden, encoder_states)

    return out[:B]


def _reference(decoder_hidden, encoder_states):
    # Pure-JAX reference mirroring the PyTorch forward exactly.
    dh = decoder_hidden[:, :, None]                             # (B, H, 1)
    scores = jnp.matmul(encoder_states, dh)                     # (B, S, 1)
    sm = jax.nn.softmax(scores, axis=1)                         # (B, S, 1)
    sm_t = jnp.swapaxes(sm, 2, 1)                               # (B, 1, S)
    out = jnp.matmul(sm_t, encoder_states)[:, 0, :]             # (B, H)
    return out


if __name__ == "__main__":
    key = jax.random.PRNGKey(0)
    k1, k2 = jax.random.split(key)

    B, S, H = 2, 8, 32
    decoder_hidden = jax.random.normal(k1, (B, H), dtype=jnp.float32)
    encoder_states = jax.random.normal(k2, (B, S, H), dtype=jnp.float32)

    out = seq2seq_attention(decoder_hidden, encoder_states)
    out = jax.block_until_ready(out)

    ref = _reference(decoder_hidden, encoder_states)
    assert out.shape == (B, H)
    max_err = jnp.max(jnp.abs(out - ref))
    assert jnp.allclose(out, ref, atol=1e-3, rtol=1e-3), f"max abs err = {max_err}"
    print("KERNEL_OK")
</pallas_src>

<mosaic_0001>
module attributes {stable_mosaic.version = 11 : i64} {
  func.func @_seq2seq_attention_kernel(%arg0: i32, %arg1: memref<8x32xf32, #tpu.memory_space<vmem>>, %arg2: memref<8x8x32xf32, #tpu.memory_space<vmem>>, %arg3: memref<8x32xf32, #tpu.memory_space<vmem>>) attributes {dimension_semantics = [#tpu.dimension_semantics<parallel>], iteration_bounds = array<i64: 1>, scalar_prefetch = 0 : i64, scratch_operands = 0 : i64, tpu.core_type = #tpu.core_type<tc>, window_params = [{transform_indices = @transform_0, window_bounds = array<i64: 8, 32>}, {transform_indices = @transform_1, window_bounds = array<i64: 8, 8, 32>}, {transform_indices = @transform_2, window_bounds = array<i64: 8, 32>}]} {
    %c0 = arith.constant 0 : index
    %c0_0 = arith.constant 0 : index
    %0 = vector.load %arg1[%c0, %c0_0] : memref<8x32xf32, #tpu.memory_space<vmem>>, vector<8x32xf32>
    %c0_1 = arith.constant 0 : index
    %c0_2 = arith.constant 0 : index
    %c0_3 = arith.constant 0 : index
    %1 = vector.load %arg2[%c0_1, %c0_2, %c0_3] : memref<8x8x32xf32, #tpu.memory_space<vmem>>, vector<8x8x32xf32>
    %2 = vector.shape_cast %0 : vector<8x32xf32> to vector<8x1x32xf32>
    %3 = vector.broadcast %2 : vector<8x1x32xf32> to vector<8x8x32xf32>
    %4 = arith.mulf %1, %3 : vector<8x8x32xf32>
    %cst = arith.constant dense<0.000000e+00> : vector<8x8xf32>
    %5 = vector.multi_reduction <add>, %4, %cst [2] : vector<8x8x32xf32> to vector<8x8xf32>
    %cst_4 = arith.constant dense<0xFF800000> : vector<8xf32>
    %6 = vector.multi_reduction <maximumf>, %5, %cst_4 [1] : vector<8x8xf32> to vector<8xf32>
    %7 = vector.shape_cast %6 : vector<8xf32> to vector<8x1xf32>
    %8 = vector.broadcast %7 : vector<8x1xf32> to vector<8x8xf32>
    %9 = arith.subf %5, %8 : vector<8x8xf32>
    %10 = math.exp %9 : vector<8x8xf32>
    %cst_5 = arith.constant dense<0.000000e+00> : vector<8xf32>
    %11 = vector.multi_reduction <add>, %10, %cst_5 [1] : vector<8x8xf32> to vector<8xf32>
    %12 = vector.shape_cast %11 : vector<8xf32> to vector<8x1xf32>
    %13 = vector.shape_cast %10 : vector<8x8xf32> to vector<8x8x1xf32>
    %14 = vector.broadcast %13 : vector<8x8x1xf32> to vector<8x8x32xf32>
    %15 = arith.mulf %14, %1 : vector<8x8x32xf32>
    %cst_6 = arith.constant dense<0.000000e+00> : vector<8x32xf32>
    %16 = vector.multi_reduction <add>, %15, %cst_6 [1] : vector<8x8x32xf32> to vector<8x32xf32>
    %17 = tpu.reciprocal %12 : vector<8x1xf32> -> vector<8x1xf32>
    %18 = vector.broadcast %17 : vector<8x1xf32> to vector<8x32xf32>
    %19 = arith.mulf %16, %18 : vector<8x32xf32>
    %c0_7 = arith.constant 0 : index
    %c0_8 = arith.constant 0 : index
    %20 = vector.load %arg3[%c0_7, %c0_8] : memref<8x32xf32, #tpu.memory_space<vmem>>, vector<8x32xf32>
    tpu.vector_store %arg3[%c0_7, %c0_8], %19 {strides = array<i32>} : memref<8x32xf32, #tpu.memory_space<vmem>>, vector<8x32xf32>,
    return
  }
  func.func @transform_0(%arg0: i32) -> (i32, i32) {
    %c0_i32 = arith.constant 0 : i32
    %c0_i32_0 = arith.constant 0 : i32
    return %arg0, %c0_i32 : i32, i32
  }
  func.func @transform_1(%arg0: i32) -> (i32, i32, i32) {
    %c0_i32 = arith.constant 0 : i32
    %c0_i32_0 = arith.constant 0 : i32
    %c0_i32_1 = arith.constant 0 : i32
    return %arg0, %c0_i32, %c0_i32_0 : i32, i32, i32
  }
  func.func @transform_2(%arg0: i32) -> (i32, i32) {
    %c0_i32 = arith.constant 0 : i32
    %c0_i32_0 = arith.constant 0 : i32
    return %arg0, %c0_i32 : i32, i32
  }
}

</mosaic_0001>

<llo_original>
// kernel: tpu_custom_call.1
$region0: #{tpu_custom_call.1}
  #allocation0 [shape = 'u32[]', space=smem, size = 0x4, offset = 0x4, fixed_abs, tag = 'smem constant byte address 0x4 - core index']
  #allocation1 [shape = 'u32[144,128]{1,0:T(1,128)}', space=vmem, size = 0x12000, scoped, tag = 'internal scratch']
  %s0 = inlined_call_operand.hbm [shape: f32[8,32], index: 0, kind: input, shape index: {}]
  %s1 = inlined_call_operand.hbm [shape: f32[8,8,32], index: 1, kind: input, shape index: {}]
  %s2 = inlined_call_operand.hbm [shape: f32[8,32], index: 2, kind: output, shape index: {}]
  %s3 = sld [smem:[#allocation0]]
  $region26: #{tpu_custom_call.1} parent=0
    _
  %s5 = ssub.s32 1, %s3
  %s6 = scalar_select 0, %s5, %s3
  $region1: #{tpu_custom_call.1} parent=0
    #allocation2 [shape = 'u8[4096]{0}', space=vmem, size = 0x1000, scoped, tag = 'input window, operand 0, single buffered']
    #allocation3 [shape = 's32[1]{0}', space=sflag, size = 0x4, scoped, tag = 'scoped memory for tpu_custom_call.1']
    #allocation4 [shape = 's32[1]{0}', space=sflag, size = 0x4, scoped, tag = 'scoped memory for tpu_custom_call.1']
    #allocation5 [shape = 'u8[32768]{0}', space=vmem, size = 0x8000, scoped, tag = 'input window, operand 1, single buffered']
    #allocation6 [shape = 's32[1]{0}', space=sflag, size = 0x4, scoped, tag = 'scoped memory for tpu_custom_call.1']
    #allocation7 [shape = 'u8[4096]{0}', space=vmem, size = 0x1000, scoped, tag = 'output window, operand 0, single buffered']
    %7 = vsyncpa [#allocation3], 0
    %8 = vsyncpa [#allocation6], 0
    %9 = vsyncpa [#allocation4], 0
    // Predicated region
    $region2: #{tpu_custom_call.1} parent=1 // pred_check
      _
    $region3: #{tpu_custom_call.1} parent=1 // pred_check_branch
      %11 = sbr.rel (0) target = $region5
    $region4: #{tpu_custom_call.1} parent=1 // pred_region
      %s13 = ssub.s32 128, 128
      %14 = vsyncadd [#allocation3], %s13
      %s16 = sshll.u32 [#allocation2], 4
      %s17 = int_to_ptr.vmem [resolvable:$true] %s16
      %19 = dma.hbm_to_vmem [thread:$0]  %s0, 128, %s17, [#allocation3]
    $region5: #{tpu_custom_call.1} parent=1 // pred_fallthru
      _
    // Predicated region
    $region6: #{tpu_custom_call.1} parent=1 // pred_check
      _
    $region7: #{tpu_custom_call.1} parent=1 // pred_check_branch
      %21 = sbr.rel (0) target = $region9
    $region8: #{tpu_custom_call.1} parent=1 // pred_region
      %s23 = ssub.s32 1024, 1024
      %24 = vsyncadd [#allocation6], %s23
      %s25 = sshll.u32 [#allocation5], 4
      %s26 = int_to_ptr.vmem [resolvable:$true] %s25
      %31 = dma.hbm_to_vmem [thread:$0]  %s1, 1024, %s26, [#allocation6], 128, 128, 8
    $region9: #{tpu_custom_call.1} parent=1 // pred_fallthru
      _
    // Predicated region
    $region10: #{tpu_custom_call.1} parent=1 // pred_check
      _
    $region11: #{tpu_custom_call.1} parent=1 // pred_check_branch
      %33 = sbr.rel (0) target = $region13
    $region12: #{tpu_custom_call.1} parent=1 // pred_region
      %34 = dma.done [#allocation3], 128
    $region13: #{tpu_custom_call.1} parent=1 // pred_fallthru
      _
    // Predicated region
    $region14: #{tpu_custom_call.1} parent=1 // pred_check
      _
    $region15: #{tpu_custom_call.1} parent=1 // pred_check_branch
      %36 = sbr.rel (0) target = $region17
    $region16: #{tpu_custom_call.1} parent=1 // pred_region
      %37 = dma.done [#allocation6], 1024
    $region17: #{tpu_custom_call.1} parent=1 // pred_fallthru
      _
    %v38 = vld [vmem:[#allocation2] sm:$0xff]
    %v39 = vld [vmem:[#allocation5] sm:$0xff]
    %v40 = vld [vmem:[#allocation5 + $0x8] sm:$0xff]
    %v41 = vld [vmem:[#allocation5 + $0x10] sm:$0xff]
    %v42 = vld [vmem:[#allocation5 + $0x18] sm:$0xff]
    %v43 = vld [vmem:[#allocation5 + $0x20] sm:$0xff]
    %v44 = vld [vmem:[#allocation5 + $0x28] sm:$0xff]
    %v45 = vld [vmem:[#allocation5 + $0x30] sm:$0xff]
    %v46 = vld [vmem:[#allocation5 + $0x38] sm:$0xff]
    %v48 = vcombine.high %v38, %v38
    %v50 = vunpack.c.l.s4 1966171168
    %v51 = vunpack.c.0.s8 %v50
    %v52 = vlaneseq
    %v53 = vshrl.u32 %v52, 7
    %v54 = vsub.s32 %v51, %v53
    %v55 = vrot.slane %v38, %v54
    %v57 = vunpack.c.l.s4 1966171168
    %v58 = vunpack.c.0.s8 %v57
    %v59 = vlaneseq
    %v60 = vshrl.u32 %v59, 7
    %v61 = vsub.s32 %v58, %v60
    %v62 = vrot.slane %v48, %v61
    %v63 = vcombine.high %v55, %v55
    %v64 = vcombine.high %v62, %v62
    %v66 = vunpack.c.l.s4 1966171168
    %v67 = vunpack.c.0.s8 %v66
    %v68 = vlaneseq
    %v69 = vshrl.u32 %v68, 7
    %v70 = vsub.s32 %v67, %v69
    %v71 = vrot.slane %v55, %v70
    %v73 = vunpack.c.l.s4 1966171168
    %v74 = vunpack.c.0.s8 %v73
    %v75 = vlaneseq
    %v76 = vshrl.u32 %v75, 7
    %v77 = vsub.s32 %v74, %v76
    %v78 = vrot.slane %v62, %v77
    %v80 = vunpack.c.l.s4 1966171168
    %v81 = vunpack.c.0.s8 %v80
    %v82 = vlaneseq
    %v83 = vshrl.u32 %v82, 7
    %v84 = vsub.s32 %v81, %v83
    %v85 = vrot.slane %v63, %v84
    %v87 = vunpack.c.l.s4 1966171168
    %v88 = vunpack.c.0.s8 %v87
    %v89 = vlaneseq
    %v90 = vshrl.u32 %v89, 7
    %v91 = vsub.s32 %v88, %v90
    %v92 = vrot.slane %v64, %v91
    %v93 = vcombine.high %v71, %v71
    %v94 = vcombine.high %v78, %v78
    %v95 = vcombine.high %v85, %v85
    %v96 = vcombine.high %v92, %v92
    %v97 = vlaneseq
    %v98 = vshrl.u32 %v97, 7
    %v99 = vsub.s32 0, %v98
    %v100 = vrot.slane %v71, %v99
    %v101 = vlaneseq
    %v102 = vshrl.u32 %v101, 7
    %v103 = vsub.s32 0, %v102
    %v104 = vrot.slane %v85, %v103
    %v105 = vlaneseq
    %v106 = vshrl.u32 %v105, 7
    %v107 = vsub.s32 0, %v106
    %v108 = vrot.slane %v93, %v107
    %v109 = vlaneseq
    %v110 = vshrl.u32 %v109, 7
    %v111 = vsub.s32 0, %v110
    %v112 = vrot.slane %v95, %v111
    %v113 = vlaneseq
    %v114 = vshrl.u32 %v113, 7
    %v115 = vsub.s32 0, %v114
    %v116 = vrot.slane %v78, %v115
    %v117 = vlaneseq
    %v118 = vshrl.u32 %v117, 7
    %v119 = vsub.s32 0, %v118
    %v120 = vrot.slane %v92, %v119
    %v121 = vlaneseq
    %v122 = vshrl.u32 %v121, 7
    %v123 = vsub.s32 0, %v122
    %v124 = vrot.slane %v94, %v123
    %v125 = vlaneseq
    %v126 = vshrl.u32 %v125, 7
    %v127 = vsub.s32 0, %v126
    %v128 = vrot.slane %v96, %v127
    %v137 = vmul.f32 %v39, %v100
    %v138 = vmul.f32 %v40, %v104
    %v139 = vmul.f32 %v41, %v108
    %v140 = vmul.f32 %v42, %v112
    %v141 = vmul.f32 %v43, %v116
    %v142 = vmul.f32 %v44, %v120
    %v143 = vmul.f32 %v45, %v124
    %v144 = vmul.f32 %v46, %v128
    %vm145 = vcmask 261120
    %v146 = vsel %vm145, %v137, 0.0
    %147 = vadd.xlane.f32.xlu0 %v146
    %v148 = vpop.xlane.xlu0 %147
    %v149 = vsel %vm145, %v138, 0.0
    %150 = vadd.xlane.f32.xlu0 %v149
    %v151 = vpop.xlane.xlu0 %150
    %v152 = vsel %vm145, %v139, 0.0
    %153 = vadd.xlane.f32.xlu0 %v152
    %v154 = vpop.xlane.xlu0 %153
    %v155 = vsel %vm145, %v140, 0.0
    %156 = vadd.xlane.f32.xlu0 %v155
    %v157 = vpop.xlane.xlu0 %156
    %v158 = vsel %vm145, %v141, 0.0
    %159 = vadd.xlane.f32.xlu0 %v158
    %v160 = vpop.xlane.xlu0 %159
    %v161 = vsel %vm145, %v142, 0.0
    %162 = vadd.xlane.f32.xlu0 %v161
    %v163 = vpop.xlane.xlu0 %162
    %v164 = vsel %vm145, %v143, 0.0
    %165 = vadd.xlane.f32.xlu0 %v164
    %v166 = vpop.xlane.xlu0 %165
    %v167 = vsel %vm145, %v144, 0.0
    %168 = vadd.xlane.f32.xlu0 %v167
    %v169 = vpop.xlane.xlu0 %168
    %v178 = vlaneseq
    %v179 = vand.u32 %v178, 127
    %v180 = vlaneseq
    %v181 = vshrl.u32 %v180, 7
    %v182 = vsub.s32 %v179, %v181
    %v183 = vrot.slane %v148, %v182
    %v184 = vlaneseq
    %v185 = vshrl.u32 %v184, 7
    %v186 = vsub.s32 %v179, %v185
    %v187 = vrot.slane %v151, %v186
    %v188 = vlaneseq
    %v189 = vshrl.u32 %v188, 7
    %v190 = vsub.s32 %v179, %v189
    %v191 = vrot.slane %v154, %v190
    %v192 = vlaneseq
    %v193 = vshrl.u32 %v192, 7
    %v194 = vsub.s32 %v179, %v193
    %v195 = vrot.slane %v157, %v194
    %v196 = vlaneseq
    %v197 = vshrl.u32 %v196, 7
    %v198 = vsub.s32 %v179, %v197
    %v199 = vrot.slane %v160, %v198
    %v200 = vlaneseq
    %v201 = vshrl.u32 %v200, 7
    %v202 = vsub.s32 %v179, %v201
    %v203 = vrot.slane %v163, %v202
    %v204 = vlaneseq
    %v205 = vshrl.u32 %v204, 7
    %v206 = vsub.s32 %v179, %v205
    %v207 = vrot.slane %v166, %v206
    %v208 = vlaneseq
    %v209 = vshrl.u32 %v208, 7
    %v210 = vsub.s32 %v179, %v209
    %v211 = vrot.slane %v169, %v210
    %vm212 = vcmask 1041409
    %v213 = vsel %vm212, %v187, %v183
    %vm214 = vcmask 1042434
    %v215 = vsel %vm214, %v191, %v213
    %vm216 = vcmask 1043459
    %v217 = vsel %vm216, %v195, %v215
    %vm218 = vcmask 1044484
    %v219 = vsel %vm218, %v199, %v217
    %vm220 = vcmask 1045509
    %v221 = vsel %vm220, %v203, %v219
    %vm222 = vcmask 1046534
    %v223 = vsel %vm222, %v207, %v221
    %vm224 = vcmask 1047559
    %v225 = vsel %vm224, %v211, %v223
    %vm227 = vcmask 64512
    %v228 = vsel %vm227, %v225, -inf
    %229 = vmax.xlane.f32.xlu0 %v228
    %v230 = vpop.xlane.xlu0 %229
    %v232 = vlaneseq
    %v233 = vshrl.u32 %v232, 7
    %v234 = vsub.s32 0, %v233
    %v235 = vrot.slane %v230, %v234
    %v236 = vlaneseq
    %v237 = vshrl.u32 %v236, 7
    %v238 = vsub.s32 1, %v237
    %v239 = vrot.slane %v230, %v238
    %v240 = vlaneseq
    %v241 = vshrl.u32 %v240, 7
    %v242 = vsub.s32 2, %v241
    %v243 = vrot.slane %v230, %v242
    %v244 = vlaneseq
    %v245 = vshrl.u32 %v244, 7
    %v246 = vsub.s32 3, %v245
    %v247 = vrot.slane %v230, %v246
    %v248 = vlaneseq
    %v249 = vshrl.u32 %v248, 7
    %v250 = vsub.s32 4, %v249
    %v251 = vrot.slane %v230, %v250
    %v252 = vlaneseq
    %v253 = vshrl.u32 %v252, 7
    %v254 = vsub.s32 5, %v253
    %v255 = vrot.slane %v230, %v254
    %v256 = vlaneseq
    %v257 = vshrl.u32 %v256, 7
    %v258 = vsub.s32 6, %v257
    %v259 = vrot.slane %v230, %v258
    %v260 = vlaneseq
    %v261 = vshrl.u32 %v260, 7
    %v262 = vsub.s32 7, %v261
    %v263 = vrot.slane %v230, %v262
    %v272 = vsub.f32 %v148, %v235
    %v273 = vsub.f32 %v151, %v239
    %v274 = vsub.f32 %v154, %v243
    %v275 = vsub.f32 %v157, %v247
    %v276 = vsub.f32 %v160, %v251
    %v277 = vsub.f32 %v163, %v255
    %v278 = vsub.f32 %v166, %v259
    %v279 = vsub.f32 %v169, %v263
    %v280 = vmul.f32 %v272, 1.442695
    %v281 = vpow.pop %v280
    %v282 = vmul.f32 %v273, 1.442695
    %v283 = vpow.pop %v282
    %v284 = vmul.f32 %v274, 1.442695
    %v285 = vpow.pop %v284
    %v286 = vmul.f32 %v275, 1.442695
    %v287 = vpow.pop %v286
    %v288 = vmul.f32 %v276, 1.442695
    %v289 = vpow.pop %v288
    %v290 = vmul.f32 %v277, 1.442695
    %v291 = vpow.pop %v290
    %v292 = vmul.f32 %v278, 1.442695
    %v293 = vpow.pop %v292
    %v294 = vmul.f32 %v279, 1.442695
    %v295 = vpow.pop %v294
    %304 = vset.pattern.permute.xlu0 0
    %305 = vperm.xlu0 %304, %v281
    %v306 = vpop.permute.xlu0 %305
    %307 = vset.pattern.permute.xlu0 0
    %308 = vperm.xlu0 %307, %v283
    %v309 = vpop.permute.xlu0 %308
    %310 = vset.pattern.permute.xlu0 0
    %311 = vperm.xlu0 %310, %v285
    %v312 = vpop.permute.xlu0 %311
    %313 = vset.pattern.permute.xlu0 0
    %314 = vperm.xlu0 %313, %v287
    %v315 = vpop.permute.xlu0 %314
    %316 = vset.pattern.permute.xlu0 0
    %317 = vperm.xlu0 %316, %v289
    %v318 = vpop.permute.xlu0 %317
    %319 = vset.pattern.permute.xlu0 0
    %320 = vperm.xlu0 %319, %v291
    %v321 = vpop.permute.xlu0 %320
    %322 = vset.pattern.permute.xlu0 0
    %323 = vperm.xlu0 %322, %v293
    %v324 = vpop.permute.xlu0 %323
    %325 = vset.pattern.permute.xlu0 0
    %326 = vperm.xlu0 %325, %v295
    %v327 = vpop.permute.xlu0 %326
    %v328 = vlaneseq
    %v329 = vshrl.u32 %v328, 7
    %v330 = vsub.s32 %v179, %v329
    %v331 = vrot.slane %v306, %v330
    %v332 = vlaneseq
    %v333 = vshrl.u32 %v332, 7
    %v334 = vsub.s32 %v179, %v333
    %v335 = vrot.slane %v309, %v334
    %v336 = vlaneseq
    %v337 = vshrl.u32 %v336, 7
    %v338 = vsub.s32 %v179, %v337
    %v339 = vrot.slane %v312, %v338
    %v340 = vlaneseq
    %v341 = vshrl.u32 %v340, 7
    %v342 = vsub.s32 %v179, %v341
    %v343 = vrot.slane %v315, %v342
    %v344 = vlaneseq
    %v345 = vshrl.u32 %v344, 7
    %v346 = vsub.s32 %v179, %v345
    %v347 = vrot.slane %v318, %v346
    %v348 = vlaneseq
    %v349 = vshrl.u32 %v348, 7
    %v350 = vsub.s32 %v179, %v349
    %v351 = vrot.slane %v321, %v350
    %v352 = vlaneseq
    %v353 = vshrl.u32 %v352, 7
    %v354 = vsub.s32 %v179, %v353
    %v355 = vrot.slane %v324, %v354
    %v356 = vlaneseq
    %v357 = vshrl.u32 %v356, 7
    %v358 = vsub.s32 %v179, %v357
    %v359 = vrot.slane %v327, %v358
    %v360 = vsel %vm212, %v335, %v331
    %v361 = vsel %vm214, %v339, %v360
    %v362 = vsel %vm216, %v343, %v361
    %v363 = vsel %vm218, %v347, %v362
    %v364 = vsel %vm220, %v351, %v363
    %v365 = vsel %vm222, %v355, %v364
    %v366 = vsel %vm224, %v359, %v365
    %v368 = vsel %vm227, %v366, 0.0
    %369 = vadd.xlane.f32.xlu0 %v368
    %v370 = vpop.xlane.xlu0 %369
    %v379 = vmul.f32 %v306, %v39
    %v380 = vmul.f32 %v309, %v40
    %v381 = vmul.f32 %v312, %v41
    %v382 = vmul.f32 %v315, %v42
    %v383 = vmul.f32 %v318, %v43
    %v384 = vmul.f32 %v321, %v44
    %v385 = vmul.f32 %v324, %v45
    %v386 = vmul.f32 %v327, %v46
    %v387 = vsel %vm145, %v379, 0.0
    %v388 = vrot.slane %v387, 4
    %v389 = vadd.f32 %v387, %v388
    %v390 = vrot.slane %v389, 2
    %v391 = vadd.f32 %v389, %v390
    %v392 = vrot.slane %v391, 1
    %v393 = vadd.f32 %v391, %v392
    %v394 = vsel %vm145, %v380, 0.0
    %v395 = vrot.slane %v394, 4
    %v396 = vadd.f32 %v394, %v395
    %v397 = vrot.slane %v396, 2
    %v398 = vadd.f32 %v396, %v397
    %v399 = vrot.slane %v398, 1
    %v400 = vadd.f32 %v398, %v399
    %v401 = vsel %vm145, %v381, 0.0
    %v402 = vrot.slane %v401, 4
    %v403 = vadd.f32 %v401, %v402
    %v404 = vrot.slane %v403, 2
    %v405 = vadd.f32 %v403, %v404
    %v406 = vrot.slane %v405, 1
    %v407 = vadd.f32 %v405, %v406
    %v408 = vsel %vm145, %v382, 0.0
    %v409 = vrot.slane %v408, 4
    %v410 = vadd.f32 %v408, %v409
    %v411 = vrot.slane %v410, 2
    %v412 = vadd.f32 %v410, %v411
    %v413 = vrot.slane %v412, 1
    %v414 = vadd.f32 %v412, %v413
    %v415 = vsel %vm145, %v383, 0.0
    %v416 = vrot.slane %v415, 4
    %v417 = vadd.f32 %v415, %v416
    %v418 = vrot.slane %v417, 2
    %v419 = vadd.f32 %v417, %v418
    %v420 = vrot.slane %v419, 1
    %v421 = vadd.f32 %v419, %v420
    %v422 = vsel %vm145, %v384, 0.0
    %v423 = vrot.slane %v422, 4
    %v424 = vadd.f32 %v422, %v423
    %v425 = vrot.slane %v424, 2
    %v426 = vadd.f32 %v424, %v425
    %v427 = vrot.slane %v426, 1
    %v428 = vadd.f32 %v426, %v427
    %v429 = vsel %vm145, %v385, 0.0
    %v430 = vrot.slane %v429, 4
    %v431 = vadd.f32 %v429, %v430
    %v432 = vrot.slane %v431, 2
    %v433 = vadd.f32 %v431, %v432
    %v434 = vrot.slane %v433, 1
    %v435 = vadd.f32 %v433, %v434
    %v436 = vsel %vm145, %v386, 0.0
    %v437 = vrot.slane %v436, 4
    %v438 = vadd.f32 %v436, %v437
    %v439 = vrot.slane %v438, 2
    %v440 = vadd.f32 %v438, %v439
    %v441 = vrot.slane %v440, 1
    %v442 = vadd.f32 %v440, %v441
    %v443 = vrcp.pop %v370
    %v445 = vrot.slane %v443, 1
    %v446 = vrot.slane %v443, 2
    %v447 = vrot.slane %v443, 3
    %v448 = vrot.slane %v443, 4
    %v449 = vrot.slane %v443, 5
    %v450 = vrot.slane %v443, 6
    %v451 = vrot.slane %v443, 7
    %v460 = vmul.f32 %v393, %v443
    %v461 = vmul.f32 %v400, %v445
    %v462 = vmul.f32 %v407, %v446
    %v463 = vmul.f32 %v414, %v447
    %v464 = vmul.f32 %v421, %v448
    %v465 = vmul.f32 %v428, %v449
    %v466 = vmul.f32 %v435, %v450
    %v467 = vmul.f32 %v442, %v451
    %v476 = vrot.slane %v461, 7
    %v477 = vsel %vm212, %v476, %v460
    %v478 = vrot.slane %v462, 6
    %v479 = vsel %vm214, %v478, %v477
    %v480 = vrot.slane %v463, 5
    %v481 = vsel %vm216, %v480, %v479
    %v482 = vrot.slane %v464, 4
    %v483 = vsel %vm218, %v482, %v481
    %v484 = vrot.slane %v465, 3
    %v485 = vsel %vm220, %v484, %v483
    %v486 = vrot.slane %v466, 2
    %v487 = vsel %vm222, %v486, %v485
    %v488 = vrot.slane %v467, 1
    %v489 = vsel %vm224, %v488, %v487
    %491 = vst.msk [vmem:[#allocation7] sm:$0xff] %vm145, %v489
    // Predicated region
    $region18: #{tpu_custom_call.1} parent=1 // pred_check
      _
    $region19: #{tpu_custom_call.1} parent=1 // pred_check_branch
      %493 = sbr.rel (0) target = $region21
    $region20: #{tpu_custom_call.1} parent=1 // pred_region
      %s495 = ssub.s32 128, 128
      %496 = vsyncadd [#allocation4], %s495
      %s498 = sshll.u32 [#allocation7], 4
      %s499 = int_to_ptr.vmem [resolvable:$true] %s498
      %501 = dma.vmem_to_hbm [thread:$0]  %s499, 128, %s2, [#allocation4]
    $region21: #{tpu_custom_call.1} parent=1 // pred_fallthru
      _
    // Predicated region
    $region22: #{tpu_custom_call.1} parent=1 // pred_check
      _
    $region23: #{tpu_custom_call.1} parent=1 // pred_check_branch
      %503 = sbr.rel (0) target = $region25
    $region24: #{tpu_custom_call.1} parent=1 // pred_region
      %504 = dma.done [#allocation4], 128
    $region25: #{tpu_custom_call.1} parent=1 // pred_fallthru
      _
    %505 = vsyncpa [#allocation3], 1
    %506 = vsyncpa [#allocation6], 1
    %507 = vsyncpa [#allocation4], 1

</llo_original>
